<compile_context>
chip_gen: v7x
topology: tpu7x:2x2x1
jax: 0.10.0
libtpu: 0.0.40
codegen_flags: <defaults>
</compile_context>

<pallas_src>
import functools

import jax
import jax.numpy as jnp
from jax.experimental import pallas as pl
from jax.experimental.pallas import tpu as pltpu


def decoder_kernel(x_ref, w1_ref, b1_ref, w2_ref, b2_ref, o_ref, *, n_batch, n_seq):
    # x_ref : (B*S, Din)  rows ordered b-major: row = b * S + s (PyTorch order)
    # w1_ref: (Din, H)    fc1 weight, (in, out) layout
    # b1_ref: (1, H)
    # w2_ref: (S*H, O)    fc2 weight, original flattened (in, out) layout
    # b2_ref: (1, O)
    # o_ref : (B, O)
    hidden = w1_ref.shape[1]

    # --- fc1 + ReLU: one MXU matmul over all (b, s) rows, one VPU pass ------
    h = jnp.dot(x_ref[...], w1_ref[...], preferred_element_type=jnp.float32)
    h = jnp.maximum(h + b1_ref[...], 0.0)                   # (B*S, H), f32

    # --- view as (B, S*H): matches torch.reshape(B, S*H) flatten order ------
    h2 = h.reshape(n_batch, n_seq * hidden)                 # small relayout

    # --- fc2: ONE MXU matmul with K = S*H, then a single bias add -----------
    y = jnp.dot(h2, w2_ref[...], preferred_element_type=jnp.float32)
    y = y + b2_ref[...]
    o_ref[...] = y.astype(o_ref.dtype)


def simple_decoder_comb_v2(x, w1_t, b1, w2_t, b2):
    """x: (B, S, Din); w1_t: (Din, H); b1: (H,); w2_t: (S*H, O); b2: (O,)."""
    B, S, Din = x.shape
    H = w1_t.shape[1]
    O = w2_t.shape[1]
    assert w2_t.shape[0] == S * H, "fc2 expects flattened dim == S * hidden_dim"

    # Free, layout-preserving view (no transpose, no extra XLA kernel):
    # b-major rows match PyTorch's reshape(B, S*H) flatten order downstream.
    x_flat = x.reshape(B * S, Din)

    vmem = pl.BlockSpec(memory_space=pltpu.MemorySpace.VMEM)
    kernel = functools.partial(decoder_kernel, n_batch=B, n_seq=S)

    # Single block, no grid: everything resident in VMEM for one invocation.
    return pl.pallas_call(
        kernel,
        out_shape=jax.ShapeDtypeStruct((B, O), x.dtype),
        in_specs=[vmem, vmem, vmem, vmem, vmem],
        out_specs=vmem,
    )(x_flat, w1_t, b1.reshape(1, H), w2_t, b2.reshape(1, O))


if __name__ == "__main__":
    # Small shapes consistent with the module (seq length is fixed at 10 by
    # the module's hidden_dim_flattened = 10 * hidden_dim).
    B, S, Din, H, O = 2, 10, 128, 128, 64

    key = jax.random.PRNGKey(0)
    kx, k1, k2, k3, k4 = jax.random.split(key, 5)
    x = jax.random.normal(kx, (B, S, Din), jnp.float32)

    # Parameters already in (in, out) layout (transposed vs. torch.nn.Linear).
    w1_t = jax.random.normal(k1, (Din, H), jnp.float32) * 0.05
    b1 = jax.random.normal(k2, (H,), jnp.float32) * 0.05
    w2_t = jax.random.normal(k3, (S * H, O), jnp.float32) * 0.05
    b2 = jax.random.normal(k4, (O,), jnp.float32) * 0.05

    out = jax.jit(simple_decoder_comb_v2)(x, w1_t, b1, w2_t, b2)
    out = jax.block_until_ready(out)

    # Pure-JAX reference mirroring the PyTorch f32 forward exactly
    # (HIGHEST precision so the reference is true f32, not bf16-pass default).
    hp = jax.lax.Precision.HIGHEST
    h_ref = jnp.maximum(jnp.einsum("bsd,dh->bsh", x, w1_t, precision=hp) + b1, 0.0)
    ref = jnp.dot(h_ref.reshape(B, S * H), w2_t, precision=hp) + b2

    assert out.shape == (B, O)
    assert jnp.allclose(out, ref, atol=1e-4, rtol=1e-4), "mismatch vs reference"
    print("KERNEL_OK")
</pallas_src>

<mosaic_0001>
module attributes {stable_mosaic.version = 11 : i64} {
  func.func @decoder_kernel(%arg0: memref<20x128xf32, #tpu.memory_space<vmem>>, %arg1: memref<128x128xf32, #tpu.memory_space<vmem>>, %arg2: memref<1x128xf32, #tpu.memory_space<vmem>>, %arg3: memref<1280x64xf32, #tpu.memory_space<vmem>>, %arg4: memref<1x64xf32, #tpu.memory_space<vmem>>, %arg5: memref<2x64xf32, #tpu.memory_space<vmem>>) attributes {dimension_semantics = [], scalar_prefetch = 0 : i64, scratch_operands = 0 : i64, tpu.core_type = #tpu.core_type<tc>} {
    %c0 = arith.constant 0 : index
    %c0_0 = arith.constant 0 : index
    %0 = vector.load %arg0[%c0, %c0_0] : memref<20x128xf32, #tpu.memory_space<vmem>>, vector<20x128xf32>
    %c0_1 = arith.constant 0 : index
    %c0_2 = arith.constant 0 : index
    %1 = vector.load %arg1[%c0_1, %c0_2] : memref<128x128xf32, #tpu.memory_space<vmem>>, vector<128x128xf32>
    %cst = arith.constant dense<0.000000e+00> : vector<20x128xf32>
    %2 = tpu.matmul %0, %1, %cst {dimension_numbers = #tpu.dot_dimension_numbers<[1], [0], [0], [1], [0, 0, 1, 1], [], []>} : vector<20x128xf32>, vector<128x128xf32>, vector<20x128xf32> -> vector<20x128xf32>
    %c0_3 = arith.constant 0 : index
    %c0_4 = arith.constant 0 : index
    %3 = vector.load %arg2[%c0_3, %c0_4] : memref<1x128xf32, #tpu.memory_space<vmem>>, vector<1x128xf32>
    %4 = vector.broadcast %3 : vector<1x128xf32> to vector<20x128xf32>
    %5 = arith.addf %2, %4 : vector<20x128xf32>
    %cst_5 = arith.constant 0.000000e+00 : f32
    %6 = vector.broadcast %cst_5 : f32 to vector<20x128xf32>
    %7 = arith.maximumf %5, %6 : vector<20x128xf32>
    %8 = vector.shape_cast %7 : vector<20x128xf32> to vector<2x1280xf32>
    %c0_6 = arith.constant 0 : index
    %c0_7 = arith.constant 0 : index
    %9 = vector.load %arg3[%c0_6, %c0_7] : memref<1280x64xf32, #tpu.memory_space<vmem>>, vector<1280x64xf32>
    %cst_8 = arith.constant dense<0.000000e+00> : vector<2x64xf32>
    %10 = tpu.matmul %8, %9, %cst_8 {dimension_numbers = #tpu.dot_dimension_numbers<[1], [0], [0], [1], [0, 0, 1, 1], [], []>} : vector<2x1280xf32>, vector<1280x64xf32>, vector<2x64xf32> -> vector<2x64xf32>
    %c0_9 = arith.constant 0 : index
    %c0_10 = arith.constant 0 : index
    %11 = vector.load %arg4[%c0_9, %c0_10] : memref<1x64xf32, #tpu.memory_space<vmem>>, vector<1x64xf32>
    %12 = vector.broadcast %11 : vector<1x64xf32> to vector<2x64xf32>
    %13 = arith.addf %10, %12 : vector<2x64xf32>
    %c0_11 = arith.constant 0 : index
    %c0_12 = arith.constant 0 : index
    %14 = vector.load %arg5[%c0_11, %c0_12] : memref<2x64xf32, #tpu.memory_space<vmem>>, vector<2x64xf32>
    tpu.vector_store %arg5[%c0_11, %c0_12], %13 {strides = array<i32>} : memref<2x64xf32, #tpu.memory_space<vmem>>, vector<2x64xf32>,
    return
  }
}

</mosaic_0001>

<llo_original>
// kernel: simple_decoder_comb_v2.1
$region0: #{simple_decoder_comb_v2.1}
  #allocation0 [shape = 'u32[]', space=smem, size = 0x4, offset = 0x4, fixed_abs, tag = 'smem constant byte address 0x4 - core index']
  #allocation1 [shape = 'u32[144,128]{1,0:T(1,128)}', space=vmem, size = 0x12000, scoped, tag = 'internal scratch']
  %s0 = inlined_call_operand.vmem [shape: f32[20,128], index: 0, kind: input, shape index: {}]
  %s1 = inlined_call_operand.vmem [shape: f32[128,128], index: 1, kind: input, shape index: {}]
  %s2 = inlined_call_operand.vmem [shape: f32[1,128], index: 2, kind: input, shape index: {}]
  %s3 = inlined_call_operand.vmem [shape: f32[1280,64], index: 3, kind: input, shape index: {}]
  %s4 = inlined_call_operand.vmem [shape: f32[1,64], index: 4, kind: input, shape index: {}]
  %s5 = inlined_call_operand.hbm [shape: f32[2,64], index: 5, kind: output, shape index: {}]
  %s6 = sld [smem:[#allocation0]]
  $region30: #{simple_decoder_comb_v2.1} parent=0
    _
  %s8 = ssub.s32 1, %s6
  %s9 = scalar_select 0, %s8, %s6
  $region1: #{simple_decoder_comb_v2.1} parent=0
    #allocation2 [shape = 'u8[1024]{0}', space=vmem, size = 0x400, scoped, tag = 'output window, operand 0, single buffered']
    #allocation3 [shape = 's32[1]{0}', space=sflag, size = 0x4, scoped, tag = 'scoped memory for simple_decoder_comb_v2.1']
    %10 = vsyncpa [#allocation3], 0
    // Predicated region
    $region2: #{simple_decoder_comb_v2.1} parent=1 // pred_check
      _
    $region3: #{simple_decoder_comb_v2.1} parent=1 // pred_check_branch
      %12 = sbr.rel (0) target = $region5
    $region4: #{simple_decoder_comb_v2.1} parent=1 // pred_region
      _
    $region5: #{simple_decoder_comb_v2.1} parent=1 // pred_fallthru
      _
    // Predicated region
    $region6: #{simple_decoder_comb_v2.1} parent=1 // pred_check
      _
    $region7: #{simple_decoder_comb_v2.1} parent=1 // pred_check_branch
      %14 = sbr.rel (0) target = $region9
    $region8: #{simple_decoder_comb_v2.1} parent=1 // pred_region
      _
    $region9: #{simple_decoder_comb_v2.1} parent=1 // pred_fallthru
      _
    // Predicated region
    $region10: #{simple_decoder_comb_v2.1} parent=1 // pred_check
      _
    $region11: #{simple_decoder_comb_v2.1} parent=1 // pred_check_branch
      %16 = sbr.rel (0) target = $region13
    $region12: #{simple_decoder_comb_v2.1} parent=1 // pred_region
      _
    $region13: #{simple_decoder_comb_v2.1} parent=1 // pred_fallthru
      _
    // Predicated region
    $region14: #{simple_decoder_comb_v2.1} parent=1 // pred_check
      _
    $region15: #{simple_decoder_comb_v2.1} parent=1 // pred_check_branch
      %18 = sbr.rel (0) target = $region17
    $region16: #{simple_decoder_comb_v2.1} parent=1 // pred_region
      _
    $region17: #{simple_decoder_comb_v2.1} parent=1 // pred_fallthru
      _
    // Predicated region
    $region18: #{simple_decoder_comb_v2.1} parent=1 // pred_check
      _
    $region19: #{simple_decoder_comb_v2.1} parent=1 // pred_check_branch
      %20 = sbr.rel (0) target = $region21
    $region20: #{simple_decoder_comb_v2.1} parent=1 // pred_region
      _
    $region21: #{simple_decoder_comb_v2.1} parent=1 // pred_fallthru
      _
    %v21 = vld [vmem:[%s0] sm:$0xff]
    %v22 = vld [vmem:[%s0 + $0x8] sm:$0xff]
    %v23 = vld [vmem:[%s0 + $0x10] sm:$0xf]
    %v24 = vld [vmem:[%s1] sm:$0xff]
    %v25 = vld [vmem:[%s1 + $0x8] sm:$0xff]
    %v26 = vld [vmem:[%s1 + $0x10] sm:$0xff]
    %v27 = vld [vmem:[%s1 + $0x18] sm:$0xff]
    %v28 = vld [vmem:[%s1 + $0x20] sm:$0xff]
    %v29 = vld [vmem:[%s1 + $0x28] sm:$0xff]
    %v30 = vld [vmem:[%s1 + $0x30] sm:$0xff]
    %v31 = vld [vmem:[%s1 + $0x38] sm:$0xff]
    %v32 = vld [vmem:[%s1 + $0x40] sm:$0xff]
    %v33 = vld [vmem:[%s1 + $0x48] sm:$0xff]
    %v34 = vld [vmem:[%s1 + $0x50] sm:$0xff]
    %v35 = vld [vmem:[%s1 + $0x58] sm:$0xff]
    %v36 = vld [vmem:[%s1 + $0x60] sm:$0xff]
    %v37 = vld [vmem:[%s1 + $0x68] sm:$0xff]
    %v38 = vld [vmem:[%s1 + $0x70] sm:$0xff]
    %v39 = vld [vmem:[%s1 + $0x78] sm:$0xff]
    %v40 = vld [vmem:[%s2] sm:$0x1]
    %v42 = vlaneseq
    %v43 = vshrl.u32 %v42, 7
    %v44 = vsub.s32 0, %v43
    %v45 = vrot.slane %v40, %v44
    %47 = vmatprep.subr.mxu0 0.0
    %48 = vmatpush1.msra.mxu0 %v24
    %49 = vmatprep.subr.mxu0 0.0
    %50 = vmatpush1.msra.mxu0 %v25
    %51 = vmatprep.subr.mxu0 0.0
    %52 = vmatpush1.msra.mxu0 %v26
    %53 = vmatprep.subr.mxu0 0.0
    %54 = vmatpush1.msra.mxu0 %v27
    %55 = vmatprep.subr.mxu0 0.0
    %56 = vmatpush1.msra.mxu0 %v28
    %57 = vmatprep.subr.mxu0 0.0
    %58 = vmatpush1.msra.mxu0 %v29
    %59 = vmatprep.subr.mxu0 0.0
    %60 = vmatpush1.msra.mxu0 %v30
    %61 = vmatprep.subr.mxu0 0.0
    %62 = vmatpush1.msra.mxu0 %v31
    %63 = vmatprep.subr.mxu0 0.0
    %64 = vmatpush1.msra.mxu0 %v32
    %65 = vmatprep.subr.mxu0 0.0
    %66 = vmatpush1.msra.mxu0 %v33
    %67 = vmatprep.subr.mxu0 0.0
    %68 = vmatpush1.msra.mxu0 %v34
    %69 = vmatprep.subr.mxu0 0.0
    %70 = vmatpush1.msra.mxu0 %v35
    %71 = vmatprep.subr.mxu0 0.0
    %72 = vmatpush1.msra.mxu0 %v36
    %73 = vmatprep.subr.mxu0 0.0
    %74 = vmatpush1.msra.mxu0 %v37
    %75 = vmatprep.subr.mxu0 0.0
    %76 = vmatpush1.msra.mxu0 %v38
    %77 = vmatprep.subr.mxu0 0.0
    %78 = vmatpush1.msra.mxu0 %v39
    %79 = vmatprep.subr.mxu0 0.0
    %80 = vmatpush1.msra.mxu0 0.0
    %81 = vmatprep.subr.mxu0 0.0
    %82 = vmatpush1.msra.mxu0 0.0
    %83 = vmatprep.subr.mxu0 0.0
    %84 = vmatpush1.msra.mxu0 0.0
    %85 = vmatprep.subr.mxu0 0.0
    %86 = vmatpush1.msra.mxu0 0.0
    %87 = vmatprep.subr.mxu0 0.0
    %88 = vmatpush1.msra.mxu0 0.0
    %89 = vmatprep.subr.mxu0 0.0
    %90 = vmatpush1.msra.mxu0 0.0
    %91 = vmatprep.subr.mxu0 0.0
    %92 = vmatpush1.msra.mxu0 0.0
    %93 = vmatprep.subr.mxu0 0.0
    %94 = vmatpush1.msra.mxu0 0.0
    %95 = vmatprep.subr.mxu0 0.0
    %96 = vmatpush1.msra.mxu0 0.0
    %97 = vmatprep.subr.mxu0 0.0
    %98 = vmatpush1.msra.mxu0 0.0
    %99 = vmatprep.subr.mxu0 0.0
    %100 = vmatpush1.msra.mxu0 0.0
    %101 = vmatprep.subr.mxu0 0.0
    %102 = vmatpush1.msra.mxu0 0.0
    %103 = vmatprep.subr.mxu0 0.0
    %104 = vmatpush1.msra.mxu0 0.0
    %105 = vmatprep.subr.mxu0 0.0
    %106 = vmatpush1.msra.mxu0 0.0
    %107 = vmatprep.subr.mxu0 0.0
    %108 = vmatpush1.msra.mxu0 0.0
    %109 = vmatprep.subr.mxu0 0.0
    %110 = vmatpush1.msra.mxu0 0.0
    %111 = vmatprep.mubr.f32.mxu0 0.0
    %112 = vmatmul.mubr.f32.gmra.mrb[0].mxu0 %v21
    %v113 = vpop.f32.mrb[0].mxu0
    %v114 = vadd.f32 %v45, %v113
    %v115 = vpop.f32.mrb[0].mxu0
    %116 = vmatprep.mubr.f32.mxu0 0.0
    %117 = vmatmul.mubr.f32.gmra.mrb[0].mxu0 %v22
    %v118 = vpop.f32.mrb[0].mxu0
    %v119 = vadd.f32 %v45, %v118
    %v120 = vpop.f32.mrb[0].mxu0
    %121 = vmatprep.mubr.f32.mxu0 0.0
    %122 = vmatmul.mubr.f32.gmra.mrb[0].mxu0 %v23
    %v123 = vpop.f32.mrb[0].mxu0
    %v124 = vadd.f32 %v45, %v123
    %v125 = vpop.f32.mrb[0].mxu0
    %126 = vdwg.mxu0
    %v127 = vmax.f32 %v114, 0.0
    %v128 = vmax.f32 %v119, 0.0
    %v129 = vmax.f32 %v124, 0.0
    %vm130 = vcmask 1040384
    %v131 = vsel %vm130, %v127, 0.0
    %v132 = vrot.slane %v128, 1
    %vm133 = vcmask 1041409
    %v134 = vsel %vm133, %v132, %v131
    %v135 = vrot.slane %v127, 1
    %v136 = vsel %vm130, %v135, 0.0
    %v137 = vrot.slane %v128, 2
    %v138 = vsel %vm133, %v137, %v136
    %v139 = vrot.slane %v127, 2
    %v140 = vsel %vm130, %v139, 0.0
    %v141 = vrot.slane %v128, 3
    %v142 = vsel %vm133, %v141, %v140
    %v143 = vrot.slane %v127, 3
    %v144 = vsel %vm130, %v143, 0.0
    %v145 = vrot.slane %v128, 4
    %v146 = vsel %vm133, %v145, %v144
    %v147 = vrot.slane %v127, 4
    %v148 = vsel %vm130, %v147, 0.0
    %v149 = vrot.slane %v128, 5
    %v150 = vsel %vm133, %v149, %v148
    %v151 = vrot.slane %v127, 5
    %v152 = vsel %vm130, %v151, 0.0
    %v153 = vrot.slane %v128, 6
    %v154 = vsel %vm133, %v153, %v152
    %v155 = vrot.slane %v127, 6
    %v156 = vsel %vm130, %v155, 0.0
    %v157 = vrot.slane %v129, 7
    %v158 = vsel %vm133, %v157, %v156
    %v159 = vrot.slane %v127, 7
    %v160 = vsel %vm130, %v159, 0.0
    %v161 = vsel %vm133, %v129, %v160
    %v162 = vsel %vm130, %v128, 0.0
    %v163 = vrot.slane %v129, 1
    %v164 = vsel %vm133, %v163, %v162
    %v165 = vsel %vm130, %v132, 0.0
    %v166 = vrot.slane %v129, 2
    %v167 = vsel %vm133, %v166, %v165
    %v168 = vld [vmem:[%s3] sm:$0xff]
    %v169 = vld [vmem:[%s3 + $0x8] sm:$0xff]
    %v170 = vld [vmem:[%s3 + $0x10] sm:$0xff]
    %v171 = vld [vmem:[%s3 + $0x18] sm:$0xff]
    %v172 = vld [vmem:[%s3 + $0x20] sm:$0xff]
    %v173 = vld [vmem:[%s3 + $0x28] sm:$0xff]
    %v174 = vld [vmem:[%s3 + $0x30] sm:$0xff]
    %v175 = vld [vmem:[%s3 + $0x38] sm:$0xff]
    %v176 = vld [vmem:[%s3 + $0x40] sm:$0xff]
    %v177 = vld [vmem:[%s3 + $0x48] sm:$0xff]
    %v178 = vld [vmem:[%s3 + $0x50] sm:$0xff]
    %v179 = vld [vmem:[%s3 + $0x58] sm:$0xff]
    %v180 = vld [vmem:[%s3 + $0x60] sm:$0xff]
    %v181 = vld [vmem:[%s3 + $0x68] sm:$0xff]
    %v182 = vld [vmem:[%s3 + $0x70] sm:$0xff]
    %v183 = vld [vmem:[%s3 + $0x78] sm:$0xff]
    %v184 = vld [vmem:[%s3 + $0x80] sm:$0xff]
    %v185 = vld [vmem:[%s3 + $0x88] sm:$0xff]
    %v186 = vld [vmem:[%s3 + $0x90] sm:$0xff]
    %v187 = vld [vmem:[%s3 + $0x98] sm:$0xff]
    %v188 = vld [vmem:[%s3 + $0xa0] sm:$0xff]
    %v189 = vld [vmem:[%s3 + $0xa8] sm:$0xff]
    %v190 = vld [vmem:[%s3 + $0xb0] sm:$0xff]
    %v191 = vld [vmem:[%s3 + $0xb8] sm:$0xff]
    %v192 = vld [vmem:[%s3 + $0xc0] sm:$0xff]
    %v193 = vld [vmem:[%s3 + $0xc8] sm:$0xff]
    %v194 = vld [vmem:[%s3 + $0xd0] sm:$0xff]
    %v195 = vld [vmem:[%s3 + $0xd8] sm:$0xff]
    %v196 = vld [vmem:[%s3 + $0xe0] sm:$0xff]
    %v197 = vld [vmem:[%s3 + $0xe8] sm:$0xff]
    %v198 = vld [vmem:[%s3 + $0xf0] sm:$0xff]
    %v199 = vld [vmem:[%s3 + $0xf8] sm:$0xff]
    %v200 = vld [vmem:[%s3 + $0x100] sm:$0xff]
    %v201 = vld [vmem:[%s3 + $0x108] sm:$0xff]
    %v202 = vld [vmem:[%s3 + $0x110] sm:$0xff]
    %v203 = vld [vmem:[%s3 + $0x118] sm:$0xff]
    %v204 = vld [vmem:[%s3 + $0x120] sm:$0xff]
    %v205 = vld [vmem:[%s3 + $0x128] sm:$0xff]
    %v206 = vld [vmem:[%s3 + $0x130] sm:$0xff]
    %v207 = vld [vmem:[%s3 + $0x138] sm:$0xff]
    %v208 = vld [vmem:[%s3 + $0x140] sm:$0xff]
    %v209 = vld [vmem:[%s3 + $0x148] sm:$0xff]
    %v210 = vld [vmem:[%s3 + $0x150] sm:$0xff]
    %v211 = vld [vmem:[%s3 + $0x158] sm:$0xff]
    %v212 = vld [vmem:[%s3 + $0x160] sm:$0xff]
    %v213 = vld [vmem:[%s3 + $0x168] sm:$0xff]
    %v214 = vld [vmem:[%s3 + $0x170] sm:$0xff]
    %v215 = vld [vmem:[%s3 + $0x178] sm:$0xff]
    %v216 = vld [vmem:[%s3 + $0x180] sm:$0xff]
    %v217 = vld [vmem:[%s3 + $0x188] sm:$0xff]
    %v218 = vld [vmem:[%s3 + $0x190] sm:$0xff]
    %v219 = vld [vmem:[%s3 + $0x198] sm:$0xff]
    %v220 = vld [vmem:[%s3 + $0x1a0] sm:$0xff]
    %v221 = vld [vmem:[%s3 + $0x1a8] sm:$0xff]
    %v222 = vld [vmem:[%s3 + $0x1b0] sm:$0xff]
    %v223 = vld [vmem:[%s3 + $0x1b8] sm:$0xff]
    %v224 = vld [vmem:[%s3 + $0x1c0] sm:$0xff]
    %v225 = vld [vmem:[%s3 + $0x1c8] sm:$0xff]
    %v226 = vld [vmem:[%s3 + $0x1d0] sm:$0xff]
    %v227 = vld [vmem:[%s3 + $0x1d8] sm:$0xff]
    %v228 = vld [vmem:[%s3 + $0x1e0] sm:$0xff]
    %v229 = vld [vmem:[%s3 + $0x1e8] sm:$0xff]
    %v230 = vld [vmem:[%s3 + $0x1f0] sm:$0xff]
    %v231 = vld [vmem:[%s3 + $0x1f8] sm:$0xff]
    %v232 = vld [vmem:[%s3 + $0x200] sm:$0xff]
    %v233 = vld [vmem:[%s3 + $0x208] sm:$0xff]
    %v234 = vld [vmem:[%s3 + $0x210] sm:$0xff]
    %v235 = vld [vmem:[%s3 + $0x218] sm:$0xff]
    %v236 = vld [vmem:[%s3 + $0x220] sm:$0xff]
    %v237 = vld [vmem:[%s3 + $0x228] sm:$0xff]
    %v238 = vld [vmem:[%s3 + $0x230] sm:$0xff]
    %v239 = vld [vmem:[%s3 + $0x238] sm:$0xff]
    %v240 = vld [vmem:[%s3 + $0x240] sm:$0xff]
    %v241 = vld [vmem:[%s3 + $0x248] sm:$0xff]
    %v242 = vld [vmem:[%s3 + $0x250] sm:$0xff]
    %v243 = vld [vmem:[%s3 + $0x258] sm:$0xff]
    %v244 = vld [vmem:[%s3 + $0x260] sm:$0xff]
    %v245 = vld [vmem:[%s3 + $0x268] sm:$0xff]
    %v246 = vld [vmem:[%s3 + $0x270] sm:$0xff]
    %v247 = vld [vmem:[%s3 + $0x278] sm:$0xff]
    %v248 = vld [vmem:[%s3 + $0x280] sm:$0xff]
    %v249 = vld [vmem:[%s3 + $0x288] sm:$0xff]
    %v250 = vld [vmem:[%s3 + $0x290] sm:$0xff]
    %v251 = vld [vmem:[%s3 + $0x298] sm:$0xff]
    %v252 = vld [vmem:[%s3 + $0x2a0] sm:$0xff]
    %v253 = vld [vmem:[%s3 + $0x2a8] sm:$0xff]
    %v254 = vld [vmem:[%s3 + $0x2b0] sm:$0xff]
    %v255 = vld [vmem:[%s3 + $0x2b8] sm:$0xff]
    %v256 = vld [vmem:[%s3 + $0x2c0] sm:$0xff]
    %v257 = vld [vmem:[%s3 + $0x2c8] sm:$0xff]
    %v258 = vld [vmem:[%s3 + $0x2d0] sm:$0xff]
    %v259 = vld [vmem:[%s3 + $0x2d8] sm:$0xff]
    %v260 = vld [vmem:[%s3 + $0x2e0] sm:$0xff]
    %v261 = vld [vmem:[%s3 + $0x2e8] sm:$0xff]
    %v262 = vld [vmem:[%s3 + $0x2f0] sm:$0xff]
    %v263 = vld [vmem:[%s3 + $0x2f8] sm:$0xff]
    %v264 = vld [vmem:[%s3 + $0x300] sm:$0xff]
    %v265 = vld [vmem:[%s3 + $0x308] sm:$0xff]
    %v266 = vld [vmem:[%s3 + $0x310] sm:$0xff]
    %v267 = vld [vmem:[%s3 + $0x318] sm:$0xff]
    %v268 = vld [vmem:[%s3 + $0x320] sm:$0xff]
    %v269 = vld [vmem:[%s3 + $0x328] sm:$0xff]
    %v270 = vld [vmem:[%s3 + $0x330] sm:$0xff]
    %v271 = vld [vmem:[%s3 + $0x338] sm:$0xff]
    %v272 = vld [vmem:[%s3 + $0x340] sm:$0xff]
    %v273 = vld [vmem:[%s3 + $0x348] sm:$0xff]
    %v274 = vld [vmem:[%s3 + $0x350] sm:$0xff]
    %v275 = vld [vmem:[%s3 + $0x358] sm:$0xff]
    %v276 = vld [vmem:[%s3 + $0x360] sm:$0xff]
    %v277 = vld [vmem:[%s3 + $0x368] sm:$0xff]
    %v278 = vld [vmem:[%s3 + $0x370] sm:$0xff]
    %v279 = vld [vmem:[%s3 + $0x378] sm:$0xff]
    %v280 = vld [vmem:[%s3 + $0x380] sm:$0xff]
    %v281 = vld [vmem:[%s3 + $0x388] sm:$0xff]
    %v282 = vld [vmem:[%s3 + $0x390] sm:$0xff]
    %v283 = vld [vmem:[%s3 + $0x398] sm:$0xff]
    %v284 = vld [vmem:[%s3 + $0x3a0] sm:$0xff]
    %v285 = vld [vmem:[%s3 + $0x3a8] sm:$0xff]
    %v286 = vld [vmem:[%s3 + $0x3b0] sm:$0xff]
    %v287 = vld [vmem:[%s3 + $0x3b8] sm:$0xff]
    %v288 = vld [vmem:[%s3 + $0x3c0] sm:$0xff]
    %v289 = vld [vmem:[%s3 + $0x3c8] sm:$0xff]
    %v290 = vld [vmem:[%s3 + $0x3d0] sm:$0xff]
    %v291 = vld [vmem:[%s3 + $0x3d8] sm:$0xff]
    %v292 = vld [vmem:[%s3 + $0x3e0] sm:$0xff]
    %v293 = vld [vmem:[%s3 + $0x3e8] sm:$0xff]
    %v294 = vld [vmem:[%s3 + $0x3f0] sm:$0xff]
    %v295 = vld [vmem:[%s3 + $0x3f8] sm:$0xff]
    %v296 = vld [vmem:[%s3 + $0x400] sm:$0xff]
    %v297 = vld [vmem:[%s3 + $0x408] sm:$0xff]
    %v298 = vld [vmem:[%s3 + $0x410] sm:$0xff]
    %v299 = vld [vmem:[%s3 + $0x418] sm:$0xff]
    %v300 = vld [vmem:[%s3 + $0x420] sm:$0xff]
    %v301 = vld [vmem:[%s3 + $0x428] sm:$0xff]
    %v302 = vld [vmem:[%s3 + $0x430] sm:$0xff]
    %v303 = vld [vmem:[%s3 + $0x438] sm:$0xff]
    %v304 = vld [vmem:[%s3 + $0x440] sm:$0xff]
    %v305 = vld [vmem:[%s3 + $0x448] sm:$0xff]
    %v306 = vld [vmem:[%s3 + $0x450] sm:$0xff]
    %v307 = vld [vmem:[%s3 + $0x458] sm:$0xff]
    %v308 = vld [vmem:[%s3 + $0x460] sm:$0xff]
    %v309 = vld [vmem:[%s3 + $0x468] sm:$0xff]
    %v310 = vld [vmem:[%s3 + $0x470] sm:$0xff]
    %v311 = vld [vmem:[%s3 + $0x478] sm:$0xff]
    %v312 = vld [vmem:[%s3 + $0x480] sm:$0xff]
    %v313 = vld [vmem:[%s3 + $0x488] sm:$0xff]
    %v314 = vld [vmem:[%s3 + $0x490] sm:$0xff]
    %v315 = vld [vmem:[%s3 + $0x498] sm:$0xff]
    %v316 = vld [vmem:[%s3 + $0x4a0] sm:$0xff]
    %v317 = vld [vmem:[%s3 + $0x4a8] sm:$0xff]
    %v318 = vld [vmem:[%s3 + $0x4b0] sm:$0xff]
    %v319 = vld [vmem:[%s3 + $0x4b8] sm:$0xff]
    %v320 = vld [vmem:[%s3 + $0x4c0] sm:$0xff]
    %v321 = vld [vmem:[%s3 + $0x4c8] sm:$0xff]
    %v322 = vld [vmem:[%s3 + $0x4d0] sm:$0xff]
    %v323 = vld [vmem:[%s3 + $0x4d8] sm:$0xff]
    %v324 = vld [vmem:[%s3 + $0x4e0] sm:$0xff]
    %v325 = vld [vmem:[%s3 + $0x4e8] sm:$0xff]
    %v326 = vld [vmem:[%s3 + $0x4f0] sm:$0xff]
    %v327 = vld [vmem:[%s3 + $0x4f8] sm:$0xff]
    %v328 = vld [vmem:[%s4] sm:$0x1]
    %v330 = vlaneseq
    %v331 = vshrl.u32 %v330, 7
    %v332 = vsub.s32 0, %v331
    %v333 = vrot.slane %v328, %v332
    %335 = vmatprep.subr.mxu0 0.0
    %336 = vmatpush1.msra.mxu0 %v168
    %337 = vmatprep.subr.mxu0 0.0
    %338 = vmatpush1.msra.mxu0 %v169
    %339 = vmatprep.subr.mxu0 0.0
    %340 = vmatpush1.msra.mxu0 %v170
    %341 = vmatprep.subr.mxu0 0.0
    %342 = vmatpush1.msra.mxu0 %v171
    %343 = vmatprep.subr.mxu0 0.0
    %344 = vmatpush1.msra.mxu0 %v172
    %345 = vmatprep.subr.mxu0 0.0
    %346 = vmatpush1.msra.mxu0 %v173
    %347 = vmatprep.subr.mxu0 0.0
    %348 = vmatpush1.msra.mxu0 %v174
    %349 = vmatprep.subr.mxu0 0.0
    %350 = vmatpush1.msra.mxu0 %v175
    %351 = vmatprep.subr.mxu0 0.0
    %352 = vmatpush1.msra.mxu0 %v176
    %353 = vmatprep.subr.mxu0 0.0
    %354 = vmatpush1.msra.mxu0 %v177
    %355 = vmatprep.subr.mxu0 0.0
    %356 = vmatpush1.msra.mxu0 %v178
    %357 = vmatprep.subr.mxu0 0.0
    %358 = vmatpush1.msra.mxu0 %v179
    %359 = vmatprep.subr.mxu0 0.0
    %360 = vmatpush1.msra.mxu0 %v180
    %361 = vmatprep.subr.mxu0 0.0
    %362 = vmatpush1.msra.mxu0 %v181
    %363 = vmatprep.subr.mxu0 0.0
    %364 = vmatpush1.msra.mxu0 %v182
    %365 = vmatprep.subr.mxu0 0.0
    %366 = vmatpush1.msra.mxu0 %v183
    %367 = vmatprep.subr.mxu0 0.0
    %368 = vmatpush1.msra.mxu0 %v184
    %369 = vmatprep.subr.mxu0 0.0
    %370 = vmatpush1.msra.mxu0 %v185
    %371 = vmatprep.subr.mxu0 0.0
    %372 = vmatpush1.msra.mxu0 %v186
    %373 = vmatprep.subr.mxu0 0.0
    %374 = vmatpush1.msra.mxu0 %v187
    %375 = vmatprep.subr.mxu0 0.0
    %376 = vmatpush1.msra.mxu0 %v188
    %377 = vmatprep.subr.mxu0 0.0
    %378 = vmatpush1.msra.mxu0 %v189
    %379 = vmatprep.subr.mxu0 0.0
    %380 = vmatpush1.msra.mxu0 %v190
    %381 = vmatprep.subr.mxu0 0.0
    %382 = vmatpush1.msra.mxu0 %v191
    %383 = vmatprep.subr.mxu0 0.0
    %384 = vmatpush1.msra.mxu0 %v192
    %385 = vmatprep.subr.mxu0 0.0
    %386 = vmatpush1.msra.mxu0 %v193
    %387 = vmatprep.subr.mxu0 0.0
    %388 = vmatpush1.msra.mxu0 %v194
    %389 = vmatprep.subr.mxu0 0.0
    %390 = vmatpush1.msra.mxu0 %v195
    %391 = vmatprep.subr.mxu0 0.0
    %392 = vmatpush1.msra.mxu0 %v196
    %393 = vmatprep.subr.mxu0 0.0
    %394 = vmatpush1.msra.mxu0 %v197
    %395 = vmatprep.subr.mxu0 0.0
    %396 = vmatpush1.msra.mxu0 %v198
    %397 = vmatprep.subr.mxu0 0.0
    %398 = vmatpush1.msra.mxu0 %v199
    %399 = vmatprep.mubr.f32.mxu0 %v138
    %400 = vmatmul.mubr.f32.gmra.mrb[0].mxu0 %v134
    %v401 = vpop.f32.mrb[0].mxu0
    %v402 = vadd.f32 %v333, %v401
    %v403 = vpop.f32.mrb[0].mxu0
    %404 = vdwg.mxu0
    %405 = vmatprep.subr.mxu0 0.0
    %406 = vmatpush1.msra.mxu0 %v200
    %407 = vmatprep.subr.mxu0 0.0
    %408 = vmatpush1.msra.mxu0 %v201
    %409 = vmatprep.subr.mxu0 0.0
    %410 = vmatpush1.msra.mxu0 %v202
    %411 = vmatprep.subr.mxu0 0.0
    %412 = vmatpush1.msra.mxu0 %v203
    %413 = vmatprep.subr.mxu0 0.0
    %414 = vmatpush1.msra.mxu0 %v204
    %415 = vmatprep.subr.mxu0 0.0
    %416 = vmatpush1.msra.mxu0 %v205
    %417 = vmatprep.subr.mxu0 0.0
    %418 = vmatpush1.msra.mxu0 %v206
    %419 = vmatprep.subr.mxu0 0.0
    %420 = vmatpush1.msra.mxu0 %v207
    %421 = vmatprep.subr.mxu0 0.0
    %422 = vmatpush1.msra.mxu0 %v208
    %423 = vmatprep.subr.mxu0 0.0
    %424 = vmatpush1.msra.mxu0 %v209
    %425 = vmatprep.subr.mxu0 0.0
    %426 = vmatpush1.msra.mxu0 %v210
    %427 = vmatprep.subr.mxu0 0.0
    %428 = vmatpush1.msra.mxu0 %v211
    %429 = vmatprep.subr.mxu0 0.0
    %430 = vmatpush1.msra.mxu0 %v212
    %431 = vmatprep.subr.mxu0 0.0
    %432 = vmatpush1.msra.mxu0 %v213
    %433 = vmatprep.subr.mxu0 0.0
    %434 = vmatpush1.msra.mxu0 %v214
    %435 = vmatprep.subr.mxu0 0.0
    %436 = vmatpush1.msra.mxu0 %v215
    %437 = vmatprep.subr.mxu0 0.0
    %438 = vmatpush1.msra.mxu0 %v216
    %439 = vmatprep.subr.mxu0 0.0
    %440 = vmatpush1.msra.mxu0 %v217
    %441 = vmatprep.subr.mxu0 0.0
    %442 = vmatpush1.msra.mxu0 %v218
    %443 = vmatprep.subr.mxu0 0.0
    %444 = vmatpush1.msra.mxu0 %v219
    %445 = vmatprep.subr.mxu0 0.0
    %446 = vmatpush1.msra.mxu0 %v220
    %447 = vmatprep.subr.mxu0 0.0
    %448 = vmatpush1.msra.mxu0 %v221
    %449 = vmatprep.subr.mxu0 0.0
    %450 = vmatpush1.msra.mxu0 %v222
    %451 = vmatprep.subr.mxu0 0.0
    %452 = vmatpush1.msra.mxu0 %v223
    %453 = vmatprep.subr.mxu0 0.0
    %454 = vmatpush1.msra.mxu0 %v224
    %455 = vmatprep.subr.mxu0 0.0
    %456 = vmatpush1.msra.mxu0 %v225
    %457 = vmatprep.subr.mxu0 0.0
    %458 = vmatpush1.msra.mxu0 %v226
    %459 = vmatprep.subr.mxu0 0.0
    %460 = vmatpush1.msra.mxu0 %v227
    %461 = vmatprep.subr.mxu0 0.0
    %462 = vmatpush1.msra.mxu0 %v228
    %463 = vmatprep.subr.mxu0 0.0
    %464 = vmatpush1.msra.mxu0 %v229
    %465 = vmatprep.subr.mxu0 0.0
    %466 = vmatpush1.msra.mxu0 %v230
    %467 = vmatprep.subr.mxu0 0.0
    %468 = vmatpush1.msra.mxu0 %v231
    %469 = vmatprep.mubr.f32.mxu0 %v146
    %470 = vmatmul.mubr.f32.gmra.mrb[0].mxu0 %v142
    %v471 = vpop.f32.mrb[0].mxu0
    %v472 = vadd.f32 %v402, %v471
    %v473 = vpop.f32.mrb[0].mxu0
    %474 = vdwg.mxu0
    %475 = vmatprep.subr.mxu0 0.0
    %476 = vmatpush1.msra.mxu0 %v232
    %477 = vmatprep.subr.mxu0 0.0
    %478 = vmatpush1.msra.mxu0 %v233
    %479 = vmatprep.subr.mxu0 0.0
    %480 = vmatpush1.msra.mxu0 %v234
    %481 = vmatprep.subr.mxu0 0.0
    %482 = vmatpush1.msra.mxu0 %v235
    %483 = vmatprep.subr.mxu0 0.0
    %484 = vmatpush1.msra.mxu0 %v236
    %485 = vmatprep.subr.mxu0 0.0
    %486 = vmatpush1.msra.mxu0 %v237
    %487 = vmatprep.subr.mxu0 0.0
    %488 = vmatpush1.msra.mxu0 %v238
    %489 = vmatprep.subr.mxu0 0.0
    %490 = vmatpush1.msra.mxu0 %v239
    %491 = vmatprep.subr.mxu0 0.0
    %492 = vmatpush1.msra.mxu0 %v240
    %493 = vmatprep.subr.mxu0 0.0
    %494 = vmatpush1.msra.mxu0 %v241
    %495 = vmatprep.subr.mxu0 0.0
    %496 = vmatpush1.msra.mxu0 %v242
    %497 = vmatprep.subr.mxu0 0.0
    %498 = vmatpush1.msra.mxu0 %v243
    %499 = vmatprep.subr.mxu0 0.0
    %500 = vmatpush1.msra.mxu0 %v244
    %501 = vmatprep.subr.mxu0 0.0
    %502 = vmatpush1.msra.mxu0 %v245
    %503 = vmatprep.subr.mxu0 0.0
    %504 = vmatpush1.msra.mxu0 %v246
    %505 = vmatprep.subr.mxu0 0.0
    %506 = vmatpush1.msra.mxu0 %v247
    %507 = vmatprep.subr.mxu0 0.0
    %508 = vmatpush1.msra.mxu0 %v248
    %509 = vmatprep.subr.mxu0 0.0
    %510 = vmatpush1.msra.mxu0 %v249
    %511 = vmatprep.subr.mxu0 0.0
    %512 = vmatpush1.msra.mxu0 %v250
    %513 = vmatprep.subr.mxu0 0.0
    %514 = vmatpush1.msra.mxu0 %v251
    %515 = vmatprep.subr.mxu0 0.0
    %516 = vmatpush1.msra.mxu0 %v252
    %517 = vmatprep.subr.mxu0 0.0
    %518 = vmatpush1.msra.mxu0 %v253
    %519 = vmatprep.subr.mxu0 0.0
    %520 = vmatpush1.msra.mxu0 %v254
    %521 = vmatprep.subr.mxu0 0.0
    %522 = vmatpush1.msra.mxu0 %v255
    %523 = vmatprep.subr.mxu0 0.0
    %524 = vmatpush1.msra.mxu0 %v256
    %525 = vmatprep.subr.mxu0 0.0
    %526 = vmatpush1.msra.mxu0 %v257
    %527 = vmatprep.subr.mxu0 0.0
    %528 = vmatpush1.msra.mxu0 %v258
    %529 = vmatprep.subr.mxu0 0.0
    %530 = vmatpush1.msra.mxu0 %v259
    %531 = vmatprep.subr.mxu0 0.0
    %532 = vmatpush1.msra.mxu0 %v260
    %533 = vmatprep.subr.mxu0 0.0
    %534 = vmatpush1.msra.mxu0 %v261
    %535 = vmatprep.subr.mxu0 0.0
    %536 = vmatpush1.msra.mxu0 %v262
    %537 = vmatprep.subr.mxu0 0.0
    %538 = vmatpush1.msra.mxu0 %v263
    %539 = vmatprep.mubr.f32.mxu0 %v154
    %540 = vmatmul.mubr.f32.gmra.mrb[0].mxu0 %v150
    %v541 = vpop.f32.mrb[0].mxu0
    %v542 = vadd.f32 %v472, %v541
    %v543 = vpop.f32.mrb[0].mxu0
    %544 = vdwg.mxu0
    %545 = vmatprep.subr.mxu0 0.0
    %546 = vmatpush1.msra.mxu0 %v264
    %547 = vmatprep.subr.mxu0 0.0
    %548 = vmatpush1.msra.mxu0 %v265
    %549 = vmatprep.subr.mxu0 0.0
    %550 = vmatpush1.msra.mxu0 %v266
    %551 = vmatprep.subr.mxu0 0.0
    %552 = vmatpush1.msra.mxu0 %v267
    %553 = vmatprep.subr.mxu0 0.0
    %554 = vmatpush1.msra.mxu0 %v268
    %555 = vmatprep.subr.mxu0 0.0
    %556 = vmatpush1.msra.mxu0 %v269
    %557 = vmatprep.subr.mxu0 0.0
    %558 = vmatpush1.msra.mxu0 %v270
    %559 = vmatprep.subr.mxu0 0.0
    %560 = vmatpush1.msra.mxu0 %v271
    %561 = vmatprep.subr.mxu0 0.0
    %562 = vmatpush1.msra.mxu0 %v272
    %563 = vmatprep.subr.mxu0 0.0
    %564 = vmatpush1.msra.mxu0 %v273
    %565 = vmatprep.subr.mxu0 0.0
    %566 = vmatpush1.msra.mxu0 %v274
    %567 = vmatprep.subr.mxu0 0.0
    %568 = vmatpush1.msra.mxu0 %v275
    %569 = vmatprep.subr.mxu0 0.0
    %570 = vmatpush1.msra.mxu0 %v276
    %571 = vmatprep.subr.mxu0 0.0
    %572 = vmatpush1.msra.mxu0 %v277
    %573 = vmatprep.subr.mxu0 0.0
    %574 = vmatpush1.msra.mxu0 %v278
    %575 = vmatprep.subr.mxu0 0.0
    %576 = vmatpush1.msra.mxu0 %v279
    %577 = vmatprep.subr.mxu0 0.0
    %578 = vmatpush1.msra.mxu0 %v280
    %579 = vmatprep.subr.mxu0 0.0
    %580 = vmatpush1.msra.mxu0 %v281
    %581 = vmatprep.subr.mxu0 0.0
    %582 = vmatpush1.msra.mxu0 %v282
    %583 = vmatprep.subr.mxu0 0.0
    %584 = vmatpush1.msra.mxu0 %v283
    %585 = vmatprep.subr.mxu0 0.0
    %586 = vmatpush1.msra.mxu0 %v284
    %587 = vmatprep.subr.mxu0 0.0
    %588 = vmatpush1.msra.mxu0 %v285
    %589 = vmatprep.subr.mxu0 0.0
    %590 = vmatpush1.msra.mxu0 %v286
    %591 = vmatprep.subr.mxu0 0.0
    %592 = vmatpush1.msra.mxu0 %v287
    %593 = vmatprep.subr.mxu0 0.0
    %594 = vmatpush1.msra.mxu0 %v288
    %595 = vmatprep.subr.mxu0 0.0
    %596 = vmatpush1.msra.mxu0 %v289
    %597 = vmatprep.subr.mxu0 0.0
    %598 = vmatpush1.msra.mxu0 %v290
    %599 = vmatprep.subr.mxu0 0.0
    %600 = vmatpush1.msra.mxu0 %v291
    %601 = vmatprep.subr.mxu0 0.0
    %602 = vmatpush1.msra.mxu0 %v292
    %603 = vmatprep.subr.mxu0 0.0
    %604 = vmatpush1.msra.mxu0 %v293
    %605 = vmatprep.subr.mxu0 0.0
    %606 = vmatpush1.msra.mxu0 %v294
    %607 = vmatprep.subr.mxu0 0.0
    %608 = vmatpush1.msra.mxu0 %v295
    %609 = vmatprep.mubr.f32.mxu0 %v161
    %610 = vmatmul.mubr.f32.gmra.mrb[0].mxu0 %v158
    %v611 = vpop.f32.mrb[0].mxu0
    %v612 = vadd.f32 %v542, %v611
    %v613 = vpop.f32.mrb[0].mxu0
    %614 = vdwg.mxu0
    %615 = vmatprep.subr.mxu0 0.0
    %616 = vmatpush1.msra.mxu0 %v296
    %617 = vmatprep.subr.mxu0 0.0
    %618 = vmatpush1.msra.mxu0 %v297
    %619 = vmatprep.subr.mxu0 0.0
    %620 = vmatpush1.msra.mxu0 %v298
    %621 = vmatprep.subr.mxu0 0.0
    %622 = vmatpush1.msra.mxu0 %v299
    %623 = vmatprep.subr.mxu0 0.0
    %624 = vmatpush1.msra.mxu0 %v300
    %625 = vmatprep.subr.mxu0 0.0
    %626 = vmatpush1.msra.mxu0 %v301
    %627 = vmatprep.subr.mxu0 0.0
    %628 = vmatpush1.msra.mxu0 %v302
    %629 = vmatprep.subr.mxu0 0.0
    %630 = vmatpush1.msra.mxu0 %v303
    %631 = vmatprep.subr.mxu0 0.0
    %632 = vmatpush1.msra.mxu0 %v304
    %633 = vmatprep.subr.mxu0 0.0
    %634 = vmatpush1.msra.mxu0 %v305
    %635 = vmatprep.subr.mxu0 0.0
    %636 = vmatpush1.msra.mxu0 %v306
    %637 = vmatprep.subr.mxu0 0.0
    %638 = vmatpush1.msra.mxu0 %v307
    %639 = vmatprep.subr.mxu0 0.0
    %640 = vmatpush1.msra.mxu0 %v308
    %641 = vmatprep.subr.mxu0 0.0
    %642 = vmatpush1.msra.mxu0 %v309
    %643 = vmatprep.subr.mxu0 0.0
    %644 = vmatpush1.msra.mxu0 %v310
    %645 = vmatprep.subr.mxu0 0.0
    %646 = vmatpush1.msra.mxu0 %v311
    %647 = vmatprep.subr.mxu0 0.0
    %648 = vmatpush1.msra.mxu0 %v312
    %649 = vmatprep.subr.mxu0 0.0
    %650 = vmatpush1.msra.mxu0 %v313
    %651 = vmatprep.subr.mxu0 0.0
    %652 = vmatpush1.msra.mxu0 %v314
    %653 = vmatprep.subr.mxu0 0.0
    %654 = vmatpush1.msra.mxu0 %v315
    %655 = vmatprep.subr.mxu0 0.0
    %656 = vmatpush1.msra.mxu0 %v316
    %657 = vmatprep.subr.mxu0 0.0
    %658 = vmatpush1.msra.mxu0 %v317
    %659 = vmatprep.subr.mxu0 0.0
    %660 = vmatpush1.msra.mxu0 %v318
    %661 = vmatprep.subr.mxu0 0.0
    %662 = vmatpush1.msra.mxu0 %v319
    %663 = vmatprep.subr.mxu0 0.0
    %664 = vmatpush1.msra.mxu0 %v320
    %665 = vmatprep.subr.mxu0 0.0
    %666 = vmatpush1.msra.mxu0 %v321
    %667 = vmatprep.subr.mxu0 0.0
    %668 = vmatpush1.msra.mxu0 %v322
    %669 = vmatprep.subr.mxu0 0.0
    %670 = vmatpush1.msra.mxu0 %v323
    %671 = vmatprep.subr.mxu0 0.0
    %672 = vmatpush1.msra.mxu0 %v324
    %673 = vmatprep.subr.mxu0 0.0
    %674 = vmatpush1.msra.mxu0 %v325
    %675 = vmatprep.subr.mxu0 0.0
    %676 = vmatpush1.msra.mxu0 %v326
    %677 = vmatprep.subr.mxu0 0.0
    %678 = vmatpush1.msra.mxu0 %v327
    %679 = vmatprep.mubr.f32.mxu0 %v167
    %680 = vmatmul.mubr.f32.gmra.mrb[0].mxu0 %v164
    %v681 = vpop.f32.mrb[0].mxu0
    %v682 = vadd.f32 %v612, %v681
    %v683 = vpop.f32.mrb[0].mxu0
    %684 = vdwg.mxu0
    %vm685 = vcmask 517120
    %686 = vst.msk [vmem:[#allocation2] sm:$0x3] %vm685, %v682
    // Predicated region
    $region22: #{simple_decoder_comb_v2.1} parent=1 // pred_check
      _
    $region23: #{simple_decoder_comb_v2.1} parent=1 // pred_check_branch
      %688 = sbr.rel (0) target = $region25
    $region24: #{simple_decoder_comb_v2.1} parent=1 // pred_region
      %s690 = ssub.s32 32, 32
      %691 = vsyncadd [#allocation3], %s690
      %s693 = sshll.u32 [#allocation2], 4
      %s694 = int_to_ptr.vmem [resolvable:$true] %s693
      %696 = dma.vmem_to_hbm [thread:$0]  %s694, 32, %s5, [#allocation3]
    $region25: #{simple_decoder_comb_v2.1} parent=1 // pred_fallthru
      _
    // Predicated region
    $region26: #{simple_decoder_comb_v2.1} parent=1 // pred_check
      _
    $region27: #{simple_decoder_comb_v2.1} parent=1 // pred_check_branch
      %698 = sbr.rel (0) target = $region29
    $region28: #{simple_decoder_comb_v2.1} parent=1 // pred_region
      %699 = dma.done [#allocation3], 32
    $region29: #{simple_decoder_comb_v2.1} parent=1 // pred_fallthru
      _
    %700 = vsyncpa [#allocation3], 1

</llo_original>
